<compile_context>
chip_gen: v7x
topology: tpu7x:2x2x1
jax: 0.10.0
libtpu: 0.0.40
codegen_flags: <defaults>
</compile_context>

<pallas_src>
import jax
import jax.numpy as jnp
from jax.experimental import pallas as pl
from jax.experimental.pallas import tpu as pltpu


# Per-tile VMEM budget. Pallas double-buffers both the input and output block,
# so live VMEM ~= 4 * tile_bytes; 3 MiB keeps that at ~12 MiB.
_TILE_BYTES_TARGET = 3 * 1024 * 1024


def _copy_kernel(x_ref, o_ref):
    # Pure copy of the current tile; the channel permutation is expressed in
    # the BlockSpec index_maps. The reshape only moves size-1 dims (never the
    # last two), so it is a free relabeling, not a relayout.
    o_ref[...] = x_ref[...].reshape(o_ref.shape)


def _pick_batch_block(b: int, slab_bytes: int, budget: int) -> int:
    """Largest divisor of b such that bb * slab_bytes <= budget (at least 1)."""
    best = 1
    for bb in range(1, b + 1):
        if b % bb == 0 and bb * slab_bytes <= budget:
            best = bb
    return best


def channel_shuffle(x: jnp.ndarray, groups: int = 1) -> jnp.ndarray:
    """Pallas channel shuffle. x: (B, C, H, W), C must be divisible by groups."""
    b, c, h, w = x.shape
    assert c % groups == 0, "channels must be divisible by groups"
    cpg = c // groups
    hw = h * w
    itemsize = jnp.dtype(x.dtype).itemsize

    # One grid step moves a (bb, cpg, H*W) slab; pack batches up to the budget.
    slab_bytes = cpg * hw * itemsize
    bb = _pick_batch_block(b, slab_bytes, _TILE_BYTES_TARGET)
    grid = (b // bb, groups)

    compiler_params = pltpu.CompilerParams(
        dimension_semantics=("parallel", "parallel"),
        vmem_limit_bytes=32 * 1024 * 1024,
    )

    if hw % 128 == 0:
        # Fast path: lane-dense, fully unmasked stores.
        # Input viewed group-major (free reshape of contiguous NCHW):
        #   x_g: (B, groups, cpg, H*W)
        # Output produced directly in interleaved channel order viewed as
        #   out3: (B, cpg, groups*H*W), where
        #   out3[b, i, j*HW + p] == out_nchw[b, i*groups + j, p]
        # so block j of the last dim is the destination of source group j.
        x_g = x.reshape(b, groups, cpg, hw)
        out3 = pl.pallas_call(
            _copy_kernel,
            out_shape=jax.ShapeDtypeStruct((b, cpg, groups * hw), x.dtype),
            grid=grid,
            in_specs=[
                pl.BlockSpec((bb, 1, cpg, hw), lambda bi, j: (bi, j, 0, 0)),
            ],
            out_specs=pl.BlockSpec((bb, cpg, hw), lambda bi, j: (bi, 0, j)),
            compiler_params=compiler_params,
        )(x_g)
        return out3.reshape(b, c, h, w)

    # General path (H*W not a multiple of 128): keep the full (H, W) as the
    # last-two dims so every block trivially satisfies the (8, 128) rule for
    # any spatial size; the group/channel dims stay in leading positions.
    x5 = x.reshape(b, groups, cpg, h, w)
    out5 = pl.pallas_call(
        _copy_kernel,
        out_shape=jax.ShapeDtypeStruct((b, cpg, groups, h, w), x.dtype),
        grid=grid,
        in_specs=[
            pl.BlockSpec((bb, 1, cpg, h, w), lambda bi, j: (bi, j, 0, 0, 0)),
        ],
        out_specs=pl.BlockSpec((bb, cpg, 1, h, w), lambda bi, j: (bi, 0, j, 0, 0)),
        compiler_params=compiler_params,
    )(x5)
    # (B, cpg, groups, H, W) -> (B, C, H, W) is a free contiguous reshape and
    # already has channels in i*groups + j order.
    return out5.reshape(b, c, h, w)


def channel_shuffle_ref(x: jnp.ndarray, groups: int = 1) -> jnp.ndarray:
    """Pure-JAX reference matching the PyTorch module exactly."""
    b, c, h, w = x.shape
    return (
        x.reshape(b, groups, c // groups, h, w)
        .transpose(0, 2, 1, 3, 4)
        .reshape(b, c, h, w)
    )


if __name__ == "__main__":
    key = jax.random.PRNGKey(0)

    # Primary test (lane-dense fast path: H*W = 256, multiple of 128).
    B, C, H, W = 2, 4, 16, 16
    groups = 2
    x = jax.random.normal(key, (B, C, H, W), dtype=jnp.float32)
    out = jax.block_until_ready(channel_shuffle(x, groups=groups))
    ref = channel_shuffle_ref(x, groups=groups)
    assert out.shape == ref.shape and out.dtype == ref.dtype
    assert jnp.array_equal(out, ref), "Pallas channel shuffle mismatch (fast path)"

    # Secondary test (general path: 7x7 spatial like ShuffleNet's last stage).
    key2 = jax.random.PRNGKey(1)
    x2 = jax.random.normal(key2, (2, 6, 7, 7), dtype=jnp.float32)
    out2 = jax.block_until_ready(channel_shuffle(x2, groups=3))
    ref2 = channel_shuffle_ref(x2, groups=3)
    assert jnp.array_equal(out2, ref2), "Pallas channel shuffle mismatch (general path)"

    print("KERNEL_OK")
</pallas_src>

<mosaic_0001>
module attributes {stable_mosaic.version = 11 : i64} {
  func.func @_copy_kernel(%arg0: i32, %arg1: i32, %arg2: memref<2x1x2x256xf32, #tpu.memory_space<vmem>>, %arg3: memref<2x2x256xf32, #tpu.memory_space<vmem>>) attributes {dimension_semantics = [#tpu.dimension_semantics<parallel>, #tpu.dimension_semantics<parallel>], iteration_bounds = array<i64: 1, 2>, scalar_prefetch = 0 : i64, scratch_operands = 0 : i64, tpu.core_type = #tpu.core_type<tc>, window_params = [{transform_indices = @transform_0, window_bounds = array<i64: 2, 1, 2, 256>}, {transform_indices = @transform_1, window_bounds = array<i64: 2, 2, 256>}]} {
    %c0 = arith.constant 0 : index
    %c0_0 = arith.constant 0 : index
    %c0_1 = arith.constant 0 : index
    %c0_2 = arith.constant 0 : index
    %0 = vector.load %arg2[%c0, %c0_0, %c0_1, %c0_2] : memref<2x1x2x256xf32, #tpu.memory_space<vmem>>, vector<2x1x2x256xf32>
    %1 = vector.shape_cast %0 : vector<2x1x2x256xf32> to vector<2x2x256xf32>
    %c0_3 = arith.constant 0 : index
    %c0_4 = arith.constant 0 : index
    %c0_5 = arith.constant 0 : index
    %2 = vector.load %arg3[%c0_3, %c0_4, %c0_5] : memref<2x2x256xf32, #tpu.memory_space<vmem>>, vector<2x2x256xf32>
    tpu.vector_store %arg3[%c0_3, %c0_4, %c0_5], %1 {strides = array<i32>} : memref<2x2x256xf32, #tpu.memory_space<vmem>>, vector<2x2x256xf32>,
    return
  }
  func.func @transform_0(%arg0: i32, %arg1: i32) -> (i32, i32, i32, i32) {
    %c0_i32 = arith.constant 0 : i32
    %c0_i32_0 = arith.constant 0 : i32
    %c0_i32_1 = arith.constant 0 : i32
    return %arg0, %arg1, %c0_i32, %c0_i32_0 : i32, i32, i32, i32
  }
  func.func @transform_1(%arg0: i32, %arg1: i32) -> (i32, i32, i32) {
    %c0_i32 = arith.constant 0 : i32
    %c0_i32_0 = arith.constant 0 : i32
    return %arg0, %c0_i32, %arg1 : i32, i32, i32
  }
}

</mosaic_0001>

<llo_original>
// kernel: tpu_custom_call.1
$region0: #{tpu_custom_call.1}
  #allocation0 [shape = 'u32[]', space=smem, size = 0x4, offset = 0x4, fixed_abs, tag = 'smem constant byte address 0x4 - core index']
  #allocation1 [shape = 'u32[144,128]{1,0:T(1,128)}', space=vmem, size = 0x12000, scoped, tag = 'internal scratch']
  %s0 = inlined_call_operand.hbm [shape: f32[2,2,2,256], index: 0, kind: input, shape index: {}]
  %s1 = inlined_call_operand.hbm [shape: f32[2,2,512], index: 1, kind: output, shape index: {}]
  %s2 = sld [smem:[#allocation0]]
  $region41: #{tpu_custom_call.1} parent=0
    _
  %s4 = ssub.s32 1, %s2
  %s5 = scalar_select 0, %s4, %s2
  $region1: #{tpu_custom_call.1} parent=0
    #allocation2 [shape = 'u8[8192]{0}', space=vmem, size = 0x2000, scoped, tag = 'input window, operand 0']
    #allocation3 [shape = 's32[2]{0}', space=sflag, size = 0x8, scoped, tag = 'scoped memory for tpu_custom_call.1']
    #allocation4 [shape = 's32[2]{0}', space=sflag, size = 0x8, scoped, tag = 'scoped memory for tpu_custom_call.1']
    #allocation5 [shape = 'u8[8192]{0}', space=vmem, size = 0x2000, scoped, tag = 'output window, operand 0']
    %6 = vsyncpa [#allocation3], 0
    %s7 = scalar_lea.sflag [#allocation3], 1
    %8 = vsyncpa %s7, 0
    %9 = vsyncpa [#allocation4], 0
    %s10 = scalar_lea.sflag [#allocation4], 1
    %11 = vsyncpa %s10, 0
    loop: start=0, step=1, limit=4
    $region2: #{tpu_custom_call.1} parent=1 // loop_pre_header
      _
    $region3: #{tpu_custom_call.1} parent=1 // loop_header
      %s13 = sphi 0, %s17
      %p14 = scmp.ge.s32.totalorder %s13, 4
      %s20 = sphi 0, %s32
      %s21 = sphi 0, %s28
      %s22 = sphi 0, %s20
      %s23 = sphi 0, %s21
      %s24 = sphi 0, %s22
      %s25 = sphi 0, %s23
      %s37 = sphi 0, %s39
      %s40 = sphi 0, %s37
      %s41 = sphi 0, %s40
      %s57 = sphi 0, %s41
      %s65 = sphi 0, %s67
      %s68 = sphi 0, %s65
      %s69 = sphi 0, %s68
      %s85 = sphi 0, %s69
    $region4: #{tpu_custom_call.1} parent=1 // loop_header_branch
      %16 = sbr.rel (%p14) target = $region8
    $region5: #{tpu_custom_call.1} parent=1 // loop_body
      %s18 = ssub.s32 %s13, 1
      %s19 = ssub.s32 %s13, 2
      %s26 = sadd.s32 1, %s21
      %p27 = scmp.ge.s32.totalorder %s26, 2
      %s28 = scalar_select %p27, 0, %s26
      %s29 = sadd.s32 1, %s20
      %s30 = scalar_select %p27, %s29, %s20
      %p31 = scmp.ge.s32.totalorder %s30, 1
      %s32 = scalar_select %p31, 0, %s30
      %s33 = ssub.s32 %s20, %s32
      %s34 = ssub.s32 %s21, %s28
      %s35 = sor.u32 %s33, %s34
      %p36 = scmp.eq.s32.totalorder %s35, 0
      %s38 = sadd.s32 %s37, 1
      %s39 = scalar_select %p36, %s37, %s38
      %p42 = pneg %p36
      %p43 = scmp.eq.s32.totalorder %s13, 1
      %p44 = por %p42, %p43
      %p45 = scmp.ne.s32.totalorder %s37, %s40
      %p46 = scmp.eq.s32.totalorder %s13, 0
      %p47 = por %p45, %p46
      %p48 = scmp.ne.s32.totalorder %s37, %s40
      %p49 = scmp.eq.s32.totalorder %s18, 1
      %p50 = por %p48, %p49
      %p51 = scmp.ne.s32.totalorder %s40, %s41
      %p52 = scmp.eq.s32.totalorder %s18, 0
      %p53 = por %p51, %p52
      %p54 = scmp.ne.s32.totalorder %s40, %s41
      %p55 = scmp.eq.s32.totalorder %s19, 1
      %p56 = por %p54, %p55
      %p58 = scmp.ne.s32.totalorder %s41, %s57
      %p59 = scmp.eq.s32.totalorder %s19, 0
      %p60 = por %p58, %p59
      %s61 = ssub.s32 %s20, %s32
      %s62 = ssub.s32 %s21, %s28
      %s63 = sor.u32 %s61, %s62
      %p64 = scmp.eq.s32.totalorder %s63, 0
      %s66 = sadd.s32 %s65, 1
      %s67 = scalar_select %p64, %s65, %s66
      %p70 = pneg %p64
      %p71 = scmp.eq.s32.totalorder %s13, 1
      %p72 = por %p70, %p71
      %p73 = scmp.ne.s32.totalorder %s65, %s68
      %p74 = scmp.eq.s32.totalorder %s13, 0
      %p75 = por %p73, %p74
      %p76 = scmp.ne.s32.totalorder %s65, %s68
      %p77 = scmp.eq.s32.totalorder %s18, 1
      %p78 = por %p76, %p77
      %p79 = scmp.ne.s32.totalorder %s68, %s69
      %p80 = scmp.eq.s32.totalorder %s18, 0
      %p81 = por %p79, %p80
      %p82 = scmp.ne.s32.totalorder %s68, %s69
      %p83 = scmp.eq.s32.totalorder %s19, 1
      %p84 = por %p82, %p83
      %p86 = scmp.ne.s32.totalorder %s69, %s85
      %p87 = scmp.eq.s32.totalorder %s19, 0
      %p88 = por %p86, %p87
      %p89 = scmp.le.s32.totalorder 1, %s13
      %p90 = scmp.lt.s32.totalorder %s13, 3
      %p91 = pnand %p89, %p90
      %p92 = pneg %p91
      // Predicated region
      $region9: #{tpu_custom_call.1} parent=5 // pred_check
        _
      $region10: #{tpu_custom_call.1} parent=5 // pred_check_branch
        %94 = sbr.rel (%p91) target = $region12
      $region11: #{tpu_custom_call.1} parent=5 // pred_region
        %s95 = ssub.s32 %s13, 1
      $region12: #{tpu_custom_call.1} parent=5 // pred_fallthru
        _
      %p96 = scmp.lt.s32.totalorder %s13, 2
      // Predicated region
      $region13: #{tpu_custom_call.1} parent=5 // pred_check
        %p97 = pneg %p96
      $region14: #{tpu_custom_call.1} parent=5 // pred_check_branch
        %99 = sbr.rel (%p97) target = $region16
      $region15: #{tpu_custom_call.1} parent=5 // pred_region
        // Predicated region
        $region17: #{tpu_custom_call.1} parent=15 // pred_check
          %p100 = pneg %p47
        $region18: #{tpu_custom_call.1} parent=15 // pred_check_branch
          %102 = sbr.rel (%p100) target = $region20
        $region19: #{tpu_custom_call.1} parent=15 // pred_region
          %s103 = sand.u32 %s37, 1
          %s104 = scalar_lea.sflag [#allocation3], %s103
          %s105 = sand.u32 %s37, 1
          %s106 = smul.addr %s105, 8
          %s107 = scalar_lea.vmem [#allocation2], %s106
          %s108 = smul.u32 2, %s20
          %s110 = ssub.s32 128, 128
          %111 = vsyncadd %s104, %s110
          %s112 = smul.addr %s21, 2
          %s113 = smul.addr %s108, 4
          %s114 = sadd.s32 %s112, %s113
          %s115 = smul.addr %s114, 32
          %s116 = scalar_lea.hbm %s0, %s115
          %s117 = sshll.u32 %s107, 4
          %s118 = int_to_ptr.vmem [resolvable:$true] %s117
          %123 = dma.hbm_to_vmem [thread:$0]  %s116, 128, %s118, %s104, 128, 64, 4
        $region20: #{tpu_custom_call.1} parent=15 // pred_fallthru
          _
      $region16: #{tpu_custom_call.1} parent=5 // pred_fallthru
        _
      %p124 = scmp.le.s32.totalorder 1, %s13
      %p125 = scmp.lt.s32.totalorder %s13, 3
      %p126 = pnand %p124, %p125
      %p127 = pneg %p126
      // Predicated region
      $region21: #{tpu_custom_call.1} parent=5 // pred_check
        _
      $region22: #{tpu_custom_call.1} parent=5 // pred_check_branch
        %129 = sbr.rel (%p126) target = $region24
      $region23: #{tpu_custom_call.1} parent=5 // pred_region
        %s130 = ssub.s32 %s13, 1
        %s131 = sand.u32 %s40, 1
        %s132 = scalar_lea.sflag [#allocation3], %s131
        %s133 = sand.u32 %s40, 1
        %s134 = smul.addr %s133, 8
        %s135 = scalar_lea.vmem [#allocation2], %s134
        // Predicated region
        $region25: #{tpu_custom_call.1} parent=23 // pred_check
          %p136 = pneg %p53
        $region26: #{tpu_custom_call.1} parent=23 // pred_check_branch
          %138 = sbr.rel (%p136) target = $region28
        $region27: #{tpu_custom_call.1} parent=23 // pred_region
          %139 = dma.done %s132, 128
        $region28: #{tpu_custom_call.1} parent=23 // pred_fallthru
          _
        %s140 = sand.u32 %s40, 1
        %s141 = scalar_lea.sflag [#allocation3], %s140
        %s142 = sand.u32 %s40, 1
        %s143 = smul.addr %s142, 8
        %s144 = scalar_lea.vmem [#allocation2], %s143
        %p145 = pneg %p53
        %p146 = pneg %p50
        %p147 = pneg %p81
        %p148 = pneg %p78
        %s149 = sand.u32 %s68, 1
        %s150 = scalar_lea.sflag [#allocation4], %s149
        %s151 = sand.u32 %s68, 1
        %s152 = smul.addr %s151, 8
        %s153 = scalar_lea.vmem [#allocation5], %s152
        %s154 = smul.u32 2, %s22
        %s155 = smul.u32 2, %s22
        %s156 = smul.u32 2, %s23
        %v157 = vld [vmem:[%s135] sm:$0xf]
        %v158 = vld [vmem:[%s135 + $0x4] sm:$0xf]
        %159 = vst [vmem:[%s153] sm:$0xf] %v157
        %160 = vst [vmem:[%s153 + $0x4] sm:$0xf] %v158
        %s161 = sand.u32 %s68, 1
        %s162 = scalar_lea.sflag [#allocation4], %s161
        %s163 = sand.u32 %s68, 1
        %s164 = smul.addr %s163, 8
        %s165 = scalar_lea.vmem [#allocation5], %s164
        // Predicated region
        $region29: #{tpu_custom_call.1} parent=23 // pred_check
          %p166 = pneg %p78
        $region30: #{tpu_custom_call.1} parent=23 // pred_check_branch
          %168 = sbr.rel (%p166) target = $region32
        $region31: #{tpu_custom_call.1} parent=23 // pred_region
          %s169 = smul.u32 2, %s22
          %s170 = smul.u32 2, %s23
          %s172 = ssub.s32 128, 128
          %173 = vsyncadd %s162, %s172
          %s174 = smul.addr %s169, 4
          %s175 = sadd.s32 %s170, %s174
          %s176 = smul.addr %s175, 32
          %s177 = scalar_lea.hbm %s1, %s176
          %s178 = sshll.u32 %s165, 4
          %s179 = int_to_ptr.vmem [resolvable:$true] %s178
          %184 = dma.vmem_to_hbm [thread:$0]  %s179, 128, %s177, %s162, 64, 128, 4
        $region32: #{tpu_custom_call.1} parent=23 // pred_fallthru
          _
      $region24: #{tpu_custom_call.1} parent=5 // pred_fallthru
        _
      %p185 = scmp.le.s32.totalorder 2, %s13
      // Predicated region
      $region33: #{tpu_custom_call.1} parent=5 // pred_check
        %p186 = pneg %p185
      $region34: #{tpu_custom_call.1} parent=5 // pred_check_branch
        %188 = sbr.rel (%p186) target = $region36
      $region35: #{tpu_custom_call.1} parent=5 // pred_region
        %s189 = ssub.s32 %s13, 2
        // Predicated region
        $region37: #{tpu_custom_call.1} parent=35 // pred_check
          %p190 = pneg %p84
        $region38: #{tpu_custom_call.1} parent=35 // pred_check_branch
          %192 = sbr.rel (%p190) target = $region40
        $region39: #{tpu_custom_call.1} parent=35 // pred_region
          %s193 = sand.u32 %s69, 1
          %s194 = scalar_lea.sflag [#allocation4], %s193
          %s195 = sand.u32 %s69, 1
          %s196 = smul.addr %s195, 8
          %s197 = scalar_lea.vmem [#allocation5], %s196
          %198 = dma.done %s194, 128
        $region40: #{tpu_custom_call.1} parent=35 // pred_fallthru
          _
      $region36: #{tpu_custom_call.1} parent=5 // pred_fallthru
        _
    $region6: #{tpu_custom_call.1} parent=1 // loop_footer
      %s17 = sadd.s32 1, %s13
    $region7: #{tpu_custom_call.1} parent=1 // loop_footer_branch
      %12 = sbr.rel target = $region3
    $region8: #{tpu_custom_call.1} parent=1 // loop_exit
      _
    %199 = vsyncpa [#allocation3], 1
    %s200 = scalar_lea.sflag [#allocation3], 1
    %201 = vsyncpa %s200, 1
    %202 = vsyncpa [#allocation4], 1
    %s203 = scalar_lea.sflag [#allocation4], 1
    %204 = vsyncpa %s203, 1

</llo_original>
